<compile_context>
chip_gen: v7x
topology: tpu7x:2x2x1
jax: 0.10.0
libtpu: 0.0.40
codegen_flags: <defaults>
</compile_context>

<pallas_src>
import numpy as np

import jax
import jax.numpy as jnp
from jax.experimental import pallas as pl
from jax.experimental.pallas import tpu as pltpu


_CHUNK_THRESHOLD_BYTES = 2 * 1024 * 1024   # chunk the DMA above ~2 MiB
_MAX_DMA_CHUNKS = 4


# ----------------------------------------------------------------------------
# Canonical identity: no kernel at all (recommended path).
# ----------------------------------------------------------------------------
def identity_forward(x: jax.Array) -> jax.Array:
    """Identity.forward(x) -> x. Zero cost: XLA elides it entirely."""
    return x


# ----------------------------------------------------------------------------
# Pallas copy kernel: fresh output buffer via HBM->HBM DMA (no VMEM staging).
# ----------------------------------------------------------------------------
def _make_identity_copy_kernel(num_chunks: int, chunk_rows: int):
    """Build a kernel that copies x -> o with `num_chunks` concurrent DMAs."""

    def kernel(x_hbm_ref, o_hbm_ref, sems):
        if num_chunks == 1:
            cp = pltpu.make_async_copy(x_hbm_ref, o_hbm_ref, sems.at[0])
            cp.start()
            cp.wait()
            return
        # Issue all DMAs first (separate semaphores), then wait on all of
        # them, so the copies overlap and keep multiple DMA queues busy.
        copies = []
        for c in range(num_chunks):
            sl = pl.ds(c * chunk_rows, chunk_rows)
            cp = pltpu.make_async_copy(
                x_hbm_ref.at[sl], o_hbm_ref.at[sl], sems.at[c]
            )
            cp.start()
            copies.append(cp)
        for cp in copies:
            cp.wait()

    return kernel


def identity_forward_pallas(x: jax.Array, *, num_chunks: int | None = None) -> jax.Array:
    """Identity that materializes a distinct output buffer with a Pallas kernel.

    Pure HBM->HBM DMA (memory_space=pl.ANY on both operands): no VMEM, no
    grid, no vector ops. The number of concurrent DMA chunks is resolved
    statically from the array size (or forced via `num_chunks`).
    """
    nbytes = int(np.prod(x.shape)) * np.dtype(x.dtype).itemsize
    if num_chunks is None:
        num_chunks = _MAX_DMA_CHUNKS if nbytes >= _CHUNK_THRESHOLD_BYTES else 1

    lead = x.shape[0] if x.ndim >= 1 else 1
    # Largest chunk count <= requested that evenly divides the leading dim.
    n = 1
    for cand in range(min(int(num_chunks), lead, _MAX_DMA_CHUNKS), 0, -1):
        if lead % cand == 0:
            n = cand
            break
    chunk_rows = (lead // n) if x.ndim >= 1 else 1

    kernel = _make_identity_copy_kernel(n, chunk_rows)
    return pl.pallas_call(
        kernel,
        out_shape=jax.ShapeDtypeStruct(x.shape, x.dtype),
        in_specs=[pl.BlockSpec(memory_space=pl.ANY)],
        out_specs=pl.BlockSpec(memory_space=pl.ANY),
        scratch_shapes=[pltpu.SemaphoreType.DMA((n,))],
    )(x)


# ----------------------------------------------------------------------------
# Opt-in zero-copy aliased variant (requires buffer donation to be zero-copy).
# ----------------------------------------------------------------------------
def _identity_alias_kernel(x_hbm_ref, o_hbm_ref):
    # Output aliases the input HBM buffer; data is already in place.
    del x_hbm_ref, o_hbm_ref


def identity_forward_aliased(x: jax.Array) -> jax.Array:
    """Zero-copy identity: output aliases the input HBM buffer.

    Only truly zero-copy when the caller donates x's buffer, e.g.
        jax.jit(identity_forward_aliased, donate_argnums=0)(x)
    Without donation XLA inserts a defensive copy (still correct, just not
    free). If x IS donated, the caller must not read x after this call.
    """
    return pl.pallas_call(
        _identity_alias_kernel,
        out_shape=jax.ShapeDtypeStruct(x.shape, x.dtype),
        in_specs=[pl.BlockSpec(memory_space=pl.ANY)],
        out_specs=pl.BlockSpec(memory_space=pl.ANY),
        input_output_aliases={0: 0},
    )(x)


if __name__ == "__main__":
    key = jax.random.PRNGKey(0)
    # Small NCHW-style input consistent with the module's usage in the SLR net.
    x = jax.random.normal(key, (2, 4, 16, 16), dtype=jnp.float32)
    # Independent host snapshot so validation is meaningful even under aliasing.
    x_host = np.asarray(x)

    # 1) Canonical zero-cost identity (no kernel launched).
    y0 = jax.block_until_ready(identity_forward(x))
    assert y0.shape == x.shape and y0.dtype == x.dtype
    assert np.array_equal(np.asarray(y0), x_host), "identity_forward mismatch"

    # 2) Pallas DMA copy, single whole-array DMA (default for small arrays).
    y1 = jax.block_until_ready(identity_forward_pallas(x))
    assert y1.shape == x.shape and y1.dtype == x.dtype
    assert np.array_equal(np.asarray(y1), x_host), "pallas copy (1 chunk) mismatch"

    # 3) Pallas DMA copy, forced chunked path to exercise overlapping DMAs.
    y2 = jax.block_until_ready(identity_forward_pallas(x, num_chunks=2))
    assert np.array_equal(np.asarray(y2), x_host), "pallas copy (2 chunks) mismatch"

    # 4) Aliased variant, validated against the host snapshot (not x itself).
    y3 = jax.block_until_ready(identity_forward_aliased(x))
    assert y3.shape == x.shape and y3.dtype == x.dtype
    assert np.array_equal(np.asarray(y3), x_host), "aliased identity mismatch"

    print("KERNEL_OK")
</pallas_src>

<mosaic_0001>
module attributes {stable_mosaic.version = 11 : i64} {
  func.func @kernel(%arg0: memref<2x4x16x16xf32, #tpu.memory_space<any>>, %arg1: memref<2x4x16x16xf32, #tpu.memory_space<any>>, %arg2: memref<1x!tpu.dma_semaphore, #tpu.memory_space<semaphore_mem>>) attributes {dimension_semantics = [], scalar_prefetch = 0 : i64, scratch_operands = 1 : i64, tpu.core_type = #tpu.core_type<tc>} {
    %c0_i32 = arith.constant 0 : i32
    %0 = tpu.memref_slice %arg2[%c0_i32] : memref<1x!tpu.dma_semaphore, #tpu.memory_space<semaphore_mem>> -> memref<1x!tpu.dma_semaphore, #tpu.memory_space<semaphore_mem>>
    %1 = tpu.memref_squeeze %0 : memref<1x!tpu.dma_semaphore, #tpu.memory_space<semaphore_mem>> -> memref<!tpu.dma_semaphore, #tpu.memory_space<semaphore_mem>>
    tpu.enqueue_dma source(%arg0 : memref<2x4x16x16xf32, #tpu.memory_space<any>>) target(%arg1 : memref<2x4x16x16xf32, #tpu.memory_space<any>>) target_semaphore(%1 : memref<!tpu.dma_semaphore, #tpu.memory_space<semaphore_mem>>)
    %c0_i32_0 = arith.constant 0 : i32
    %2 = tpu.memref_slice %arg2[%c0_i32_0] : memref<1x!tpu.dma_semaphore, #tpu.memory_space<semaphore_mem>> -> memref<1x!tpu.dma_semaphore, #tpu.memory_space<semaphore_mem>>
    %3 = tpu.memref_squeeze %2 : memref<1x!tpu.dma_semaphore, #tpu.memory_space<semaphore_mem>> -> memref<!tpu.dma_semaphore, #tpu.memory_space<semaphore_mem>>
    tpu.wait_dma2 semaphore(%3 : memref<!tpu.dma_semaphore, #tpu.memory_space<semaphore_mem>>) src(%arg0 : memref<2x4x16x16xf32, #tpu.memory_space<any>>) dst(%arg1 : memref<2x4x16x16xf32, #tpu.memory_space<any>>)
    return
  }
}

</mosaic_0001>

<llo_original>
// kernel: tpu_custom_call.1
$region0: #{tpu_custom_call.1}
  #allocation0 [shape = 'u32[]', space=smem, size = 0x4, offset = 0x4, fixed_abs, tag = 'smem constant byte address 0x4 - core index']
  #allocation1 [shape = 'u32[144,128]{1,0:T(1,128)}', space=vmem, size = 0x12000, scoped, tag = 'internal scratch']
  #allocation2 [shape = 's32[1]{0}', space=sflag, size = 0x4, scoped, tag = 'scratch operand']
  #allocation3 [shape = 's32[]', space=sflag, size = 0x4, offset = 0, fixed_abs, tag = 'sflag constant byte address 0x0 - dummy sync flag']
  #allocation4 [shape = 'u32[0]{0}', space=smem, size = 0, offset = 0, fixed_abs, tag = 'smem constant byte address 0x0 - null']
  %s0 = inlined_call_operand.hbm [shape: f32[2,4,16,16], index: 0, kind: input, shape index: {}]
  %s1 = inlined_call_operand.hbm [shape: f32[2,4,16,16], index: 1, kind: output, shape index: {}]
  %s2 = sld [smem:[#allocation0]]
  $region2: #{tpu_custom_call.1} parent=0
    _
  %s4 = ssub.s32 1, %s2
  %s5 = scalar_select 0, %s4, %s2
  %s7 = sshll.u32 1, 14
  %s8 = sxor.u32 4294967295, %s7
  %s11 = sshll.u32 3, 24
  %s12 = sxor.u32 4294967295, %s11
  %s13 = sand.u32 0, %s12
  %s15 = sor.u32 %s13, 0
  %18 = dma.general %s0, 2048, %s1, [#allocation2], [#allocation3], [#allocation4], %s15, 0
  %s19 = smul.u32 2, 4
  %s20 = smul.u32 %s19, 16
  %s21 = smul.u32 %s20, 1
  %s22 = sshll.u32 %s21, 4
  %23 = dma.done [#allocation2], %s22
  %24 = vsyncmov [#allocation2]
  %s25 = vpop.sfrf %24
  %p26 = scmp.eq.s32.totalorder %s25, 0
  %p27 = pneg %p26
  %29 = shalt.err (%p27)

</llo_original>
